<compile_context>
chip_gen: v6e
topology: v6e:2x2x1
jax: 0.10.0
libtpu: 0.0.40
codegen_flags: <defaults>
</compile_context>

<pallas_src>
import functools

import jax
import jax.numpy as jnp
from jax.experimental import pallas as pl
from jax.experimental.pallas import tpu as pltpu


def _iou_loss_kernel(n_ref, pred_ref, target_ref, out_ref, *, eps, tr):
    # n_ref:      (1,) int32 in SMEM (scalar-prefetched valid-box count)
    # pred_ref:   (4, TR, 128) f32 VMEM tile
    # target_ref: (4, TR, 128) f32 VMEM tile
    # out_ref:    (8, 128) f32 partial-sum block for this grid step

    # Per-coordinate planes as dense (TR, 128) tiles (indexing the ref per
    # plane keeps live ranges small -- no full (4,TR,128) value materialized).
    px1, py1, px2, py2 = pred_ref[0], pred_ref[1], pred_ref[2], pred_ref[3]
    tx1, ty1, tx2, ty2 = target_ref[0], target_ref[1], target_ref[2], target_ref[3]

    x1 = jnp.maximum(px1, tx1)
    y1 = jnp.maximum(py1, ty1)
    x2 = jnp.minimum(px2, tx2)
    y2 = jnp.minimum(py2, ty2)

    inter = jnp.maximum(x2 - x1, 0.0) * jnp.maximum(y2 - y1, 0.0)
    pred_area = (px2 - px1) * (py2 - py1)
    tgt_area = (tx2 - tx1) * (ty2 - ty1)
    union = pred_area + tgt_area - inter + eps
    loss = 1.0 - inter / union                                # (TR, 128)

    # Mask lane/row padding.  Box index of element (row, lane) in this tile:
    #   (program_id * TR + row) * 128 + lane
    row = jax.lax.broadcasted_iota(jnp.int32, (tr, 128), 0)
    lane = jax.lax.broadcasted_iota(jnp.int32, (tr, 128), 1)
    gidx = (pl.program_id(0) * tr + row) * 128 + lane
    loss = jnp.where(gidx < n_ref[0], loss, 0.0)

    # Fold TR rows into an (8, 128) partial sum with elementwise VPU adds
    # (the single cross-lane reduction is paid once, outside the kernel).
    out_ref[...] = loss.reshape(tr // 8, 8, 128).sum(axis=0)


def iou_loss(pred, target, eps=1e-6, tile_rows=512):
    """pred, target: [N, 4] boxes (x1, y1, x2, y2). Returns scalar mean IoU loss."""
    assert pred.shape == target.shape and pred.shape[-1] == 4
    n = pred.shape[0]
    assert n >= 1, "IoULoss: mean over zero boxes is undefined."

    r = (n + 127) // 128                       # rows of 128 boxes
    tr = min(tile_rows, ((r + 7) // 8) * 8)    # tile rows: multiple of 8, bounded
    r_pad = ((r + tr - 1) // tr) * tr          # rows padded to a multiple of tr
    num_tiles = r_pad // tr
    # Per-step VMEM: 2 inputs x 2 buffers x (4*tr*128*4B) = 4 MiB at tr=512,
    # safe on v5e/v6e/v7x scoped-VMEM defaults.

    # TODO(synk): if the producer can emit the (4, R, 128) layout directly,
    # drop this transpose+pad (it costs an extra HBM round trip over the data).
    def prep(x):
        x = jnp.asarray(x, jnp.float32).T                  # (4, N)
        x = jnp.pad(x, ((0, 0), (0, r_pad * 128 - n)))     # (4, r_pad*128)
        return x.reshape(4, r_pad, 128)

    pred_t = prep(pred)
    target_t = prep(target)
    n_arr = jnp.array([n], jnp.int32)          # scalar-prefetch: valid-box count

    kernel = functools.partial(_iou_loss_kernel, eps=float(eps), tr=tr)
    partials = pl.pallas_call(
        kernel,
        out_shape=jax.ShapeDtypeStruct((num_tiles * 8, 128), jnp.float32),
        grid_spec=pltpu.PrefetchScalarGridSpec(
            num_scalar_prefetch=1,
            grid=(num_tiles,),
            in_specs=[
                pl.BlockSpec((4, tr, 128), lambda i, n_ref: (0, i, 0)),
                pl.BlockSpec((4, tr, 128), lambda i, n_ref: (0, i, 0)),
            ],
            out_specs=pl.BlockSpec((8, 128), lambda i, n_ref: (i, 0)),
        ),
        compiler_params=pltpu.CompilerParams(
            dimension_semantics=("parallel",),
        ),
    )(n_arr, pred_t, target_t)

    # Tiny final reduction over the per-tile partial sums + mean.
    return jnp.sum(partials) / jnp.float32(n)


def _iou_loss_ref(pred, target, eps=1e-6):
    x1 = jnp.maximum(pred[:, 0], target[:, 0])
    y1 = jnp.maximum(pred[:, 1], target[:, 1])
    x2 = jnp.minimum(pred[:, 2], target[:, 2])
    y2 = jnp.minimum(pred[:, 3], target[:, 3])
    inter = jnp.clip(x2 - x1, 0, None) * jnp.clip(y2 - y1, 0, None)
    pa = (pred[:, 2] - pred[:, 0]) * (pred[:, 3] - pred[:, 1])
    ta = (target[:, 2] - target[:, 0]) * (target[:, 3] - target[:, 1])
    union = pa + ta - inter + eps
    return jnp.mean(1.0 - inter / union)


if __name__ == "__main__":
    key = jax.random.PRNGKey(0)
    k1, k2, k3, k4 = jax.random.split(key, 4)
    N = 8  # number of boxes

    # build valid boxes: (x1, y1) uniform, (x2, y2) = (x1, y1) + positive w/h
    def make_boxes(ka, kb):
        xy1 = jax.random.uniform(ka, (N, 2), jnp.float32, 0.0, 10.0)
        wh = jax.random.uniform(kb, (N, 2), jnp.float32, 1.0, 5.0)
        return jnp.concatenate([xy1, xy1 + wh], axis=1)   # [N, 4]

    pred = make_boxes(k1, k2)
    target = make_boxes(k3, k4)

    loss = iou_loss(pred, target)
    jax.block_until_ready(loss)

    ref = _iou_loss_ref(pred, target)
    assert jnp.allclose(loss, ref, atol=1e-5, rtol=1e-5), (loss, ref)
    print("KERNEL_OK")
</pallas_src>

<mosaic_0001>
module attributes {stable_mosaic.version = 11 : i64} {
  func.func @_iou_loss_kernel(%arg0: i32, %arg1: memref<1xi32, #tpu.memory_space<smem>>, %arg2: memref<4x8x128xf32, #tpu.memory_space<vmem>>, %arg3: memref<4x8x128xf32, #tpu.memory_space<vmem>>, %arg4: memref<8x128xf32, #tpu.memory_space<vmem>>) attributes {dimension_semantics = [#tpu.dimension_semantics<parallel>], iteration_bounds = array<i64: 1>, scalar_prefetch = 1 : i64, scratch_operands = 0 : i64, tpu.core_type = #tpu.core_type<tc>, window_params = [{transform_indices = @transform_0, window_bounds = array<i64: 4, 8, 128>}, {transform_indices = @transform_1, window_bounds = array<i64: 4, 8, 128>}, {transform_indices = @transform_2, window_bounds = array<i64: 8, 128>}]} {
    %c0 = arith.constant 0 : index
    %c0_0 = arith.constant 0 : index
    %c0_1 = arith.constant 0 : index
    %0 = vector.load %arg2[%c0, %c0_0, %c0_1] : memref<4x8x128xf32, #tpu.memory_space<vmem>>, vector<1x8x128xf32>
    %1 = vector.shape_cast %0 : vector<1x8x128xf32> to vector<8x128xf32>
    %c1 = arith.constant 1 : index
    %c0_2 = arith.constant 0 : index
    %c0_3 = arith.constant 0 : index
    %2 = vector.load %arg2[%c1, %c0_2, %c0_3] : memref<4x8x128xf32, #tpu.memory_space<vmem>>, vector<1x8x128xf32>
    %3 = vector.shape_cast %2 : vector<1x8x128xf32> to vector<8x128xf32>
    %c2 = arith.constant 2 : index
    %c0_4 = arith.constant 0 : index
    %c0_5 = arith.constant 0 : index
    %4 = vector.load %arg2[%c2, %c0_4, %c0_5] : memref<4x8x128xf32, #tpu.memory_space<vmem>>, vector<1x8x128xf32>
    %5 = vector.shape_cast %4 : vector<1x8x128xf32> to vector<8x128xf32>
    %c3 = arith.constant 3 : index
    %c0_6 = arith.constant 0 : index
    %c0_7 = arith.constant 0 : index
    %6 = vector.load %arg2[%c3, %c0_6, %c0_7] : memref<4x8x128xf32, #tpu.memory_space<vmem>>, vector<1x8x128xf32>
    %7 = vector.shape_cast %6 : vector<1x8x128xf32> to vector<8x128xf32>
    %c0_8 = arith.constant 0 : index
    %c0_9 = arith.constant 0 : index
    %c0_10 = arith.constant 0 : index
    %8 = vector.load %arg3[%c0_8, %c0_9, %c0_10] : memref<4x8x128xf32, #tpu.memory_space<vmem>>, vector<1x8x128xf32>
    %9 = vector.shape_cast %8 : vector<1x8x128xf32> to vector<8x128xf32>
    %c1_11 = arith.constant 1 : index
    %c0_12 = arith.constant 0 : index
    %c0_13 = arith.constant 0 : index
    %10 = vector.load %arg3[%c1_11, %c0_12, %c0_13] : memref<4x8x128xf32, #tpu.memory_space<vmem>>, vector<1x8x128xf32>
    %11 = vector.shape_cast %10 : vector<1x8x128xf32> to vector<8x128xf32>
    %c2_14 = arith.constant 2 : index
    %c0_15 = arith.constant 0 : index
    %c0_16 = arith.constant 0 : index
    %12 = vector.load %arg3[%c2_14, %c0_15, %c0_16] : memref<4x8x128xf32, #tpu.memory_space<vmem>>, vector<1x8x128xf32>
    %13 = vector.shape_cast %12 : vector<1x8x128xf32> to vector<8x128xf32>
    %c3_17 = arith.constant 3 : index
    %c0_18 = arith.constant 0 : index
    %c0_19 = arith.constant 0 : index
    %14 = vector.load %arg3[%c3_17, %c0_18, %c0_19] : memref<4x8x128xf32, #tpu.memory_space<vmem>>, vector<1x8x128xf32>
    %15 = vector.shape_cast %14 : vector<1x8x128xf32> to vector<8x128xf32>
    %16 = arith.maximumf %1, %9 : vector<8x128xf32>
    %17 = arith.maximumf %3, %11 : vector<8x128xf32>
    %18 = arith.minimumf %5, %13 : vector<8x128xf32>
    %19 = arith.minimumf %7, %15 : vector<8x128xf32>
    %20 = arith.subf %18, %16 : vector<8x128xf32>
    %cst = arith.constant 0.000000e+00 : f32
    %21 = vector.broadcast %cst : f32 to vector<8x128xf32>
    %22 = arith.maximumf %20, %21 : vector<8x128xf32>
    %23 = arith.subf %19, %17 : vector<8x128xf32>
    %cst_20 = arith.constant 0.000000e+00 : f32
    %24 = vector.broadcast %cst_20 : f32 to vector<8x128xf32>
    %25 = arith.maximumf %23, %24 : vector<8x128xf32>
    %26 = arith.mulf %22, %25 : vector<8x128xf32>
    %27 = arith.subf %5, %1 : vector<8x128xf32>
    %28 = arith.subf %7, %3 : vector<8x128xf32>
    %29 = arith.mulf %27, %28 : vector<8x128xf32>
    %30 = arith.subf %13, %9 : vector<8x128xf32>
    %31 = arith.subf %15, %11 : vector<8x128xf32>
    %32 = arith.mulf %30, %31 : vector<8x128xf32>
    %33 = arith.addf %29, %32 : vector<8x128xf32>
    %34 = arith.subf %33, %26 : vector<8x128xf32>
    %cst_21 = arith.constant 9.99999997E-7 : f32
    %35 = vector.broadcast %cst_21 : f32 to vector<8x128xf32>
    %36 = arith.addf %34, %35 : vector<8x128xf32>
    %37 = arith.divf %26, %36 : vector<8x128xf32>
    %cst_22 = arith.constant 1.000000e+00 : f32
    %38 = vector.broadcast %cst_22 : f32 to vector<8x128xf32>
    %39 = arith.subf %38, %37 : vector<8x128xf32>
    %40 = tpu.iota {dimensions = array<i32: 0>} : vector<8x128xi32>
    %41 = tpu.iota {dimensions = array<i32: 1>} : vector<8x128xi32>
    %c8_i32 = arith.constant 8 : i32
    %42 = arith.muli %arg0, %c8_i32 : i32
    %43 = vector.broadcast %42 : i32 to vector<8x128xi32>
    %44 = arith.addi %43, %40 : vector<8x128xi32>
    %c128_i32 = arith.constant 128 : i32
    %45 = vector.broadcast %c128_i32 : i32 to vector<8x128xi32>
    %46 = arith.muli %44, %45 : vector<8x128xi32>
    %47 = arith.addi %46, %41 : vector<8x128xi32>
    %c0_23 = arith.constant 0 : index
    %48 = memref.load %arg1[%c0_23] : memref<1xi32, #tpu.memory_space<smem>>
    %49 = vector.broadcast %48 : i32 to vector<8x128xi32>
    %50 = arith.cmpi slt, %47, %49 : vector<8x128xi32>
    %cst_24 = arith.constant 0.000000e+00 : f32
    %51 = vector.broadcast %cst_24 : f32 to vector<8x128xf32>
    %52 = arith.select %50, %39, %51 : vector<8x128xi1>, vector<8x128xf32>
    %53 = vector.shape_cast %52 : vector<8x128xf32> to vector<1x8x128xf32>
    %cst_25 = arith.constant dense<0.000000e+00> : vector<8x128xf32>
    %54 = vector.multi_reduction <add>, %53, %cst_25 [0] : vector<1x8x128xf32> to vector<8x128xf32>
    %c0_26 = arith.constant 0 : index
    %c0_27 = arith.constant 0 : index
    %55 = vector.load %arg4[%c0_26, %c0_27] : memref<8x128xf32, #tpu.memory_space<vmem>>, vector<8x128xf32>
    tpu.vector_store %arg4[%c0_26, %c0_27], %54 {strides = array<i32>} : memref<8x128xf32, #tpu.memory_space<vmem>>, vector<8x128xf32>,
    return
  }
  func.func @transform_0(%arg0: i32, %arg1: memref<1xi32, #tpu.memory_space<smem>>) -> (i32, i32, i32) {
    %c0_i32 = arith.constant 0 : i32
    %c0_i32_0 = arith.constant 0 : i32
    %c0_i32_1 = arith.constant 0 : i32
    return %c0_i32, %arg0, %c0_i32_0 : i32, i32, i32
  }
  func.func @transform_1(%arg0: i32, %arg1: memref<1xi32, #tpu.memory_space<smem>>) -> (i32, i32, i32) {
    %c0_i32 = arith.constant 0 : i32
    %c0_i32_0 = arith.constant 0 : i32
    %c0_i32_1 = arith.constant 0 : i32
    return %c0_i32, %arg0, %c0_i32_0 : i32, i32, i32
  }
  func.func @transform_2(%arg0: i32, %arg1: memref<1xi32, #tpu.memory_space<smem>>) -> (i32, i32) {
    %c0_i32 = arith.constant 0 : i32
    %c0_i32_0 = arith.constant 0 : i32
    return %arg0, %c0_i32 : i32, i32
  }
}

</mosaic_0001>

<llo_original>
// kernel: tpu_custom_call.1
$region0: #{tpu_custom_call.1}
  #allocation0 [shape = 'u32[]', space=smem, size = 0x4, offset = 0x4, fixed_abs, tag = 'smem constant byte address 0x4 - core index']
  #allocation1 [shape = 'u32[144,128]{1,0:T(1,128)}', space=vmem, size = 0x12000, scoped, tag = 'internal scratch']
  #allocation2 [shape = 's32[1]{0}', space=sflag, size = 0x4, scoped, tag = 'scoped memory for tpu_custom_call.1']
  #allocation3 [shape = 's32[1]{0:T(128)S(6)}', space=smem, size = 0x200, scoped, tag = 'prefetched SMEM operand 0']
  %s0 = inlined_call_operand.<no memory space> [shape: s32[1], index: 0, kind: input, shape index: {}]
  %s1 = inlined_call_operand.hbm [shape: f32[4,8,128], index: 1, kind: input, shape index: {}]
  %s2 = inlined_call_operand.hbm [shape: f32[4,8,128], index: 2, kind: input, shape index: {}]
  %s3 = inlined_call_operand.hbm [shape: f32[8,128], index: 3, kind: output, shape index: {}]
  %s4 = sld [smem:[#allocation0]]
  $region26: #{tpu_custom_call.1} parent=0
    _
  %s6 = ssub.s32 1, %s4
  %s7 = scalar_select 0, %s6, %s4
  %8 = sst [smem:[#allocation3]] %s0
  $region1: #{tpu_custom_call.1} parent=0
    #allocation4 [shape = 'u8[16384]{0}', space=vmem, size = 0x4000, scoped, tag = 'input window, operand 1, single buffered']
    #allocation5 [shape = 's32[1]{0}', space=sflag, size = 0x4, scoped, tag = 'scoped memory for tpu_custom_call.1']
    #allocation6 [shape = 's32[1]{0}', space=sflag, size = 0x4, scoped, tag = 'scoped memory for tpu_custom_call.1']
    #allocation7 [shape = 'u8[16384]{0}', space=vmem, size = 0x4000, scoped, tag = 'input window, operand 2, single buffered']
    #allocation8 [shape = 's32[1]{0}', space=sflag, size = 0x4, scoped, tag = 'scoped memory for tpu_custom_call.1']
    #allocation9 [shape = 'u8[4096]{0}', space=vmem, size = 0x1000, scoped, tag = 'output window, operand 0, single buffered']
    %9 = vsyncpa [#allocation5], 0
    %10 = vsyncpa [#allocation8], 0
    %11 = vsyncpa [#allocation6], 0
    // Predicated region
    $region2: #{tpu_custom_call.1} parent=1 // pred_check
      _
    $region3: #{tpu_custom_call.1} parent=1 // pred_check_branch
      %13 = sbr.rel (0) target = $region5
    $region4: #{tpu_custom_call.1} parent=1 // pred_region
      %s15 = ssub.s32 512, 512
      %16 = vsyncadd [#allocation5], %s15
      %s17 = sshll.u32 [#allocation4], 4
      %s18 = int_to_ptr.vmem [resolvable:$true] %s17
      %23 = dma.hbm_to_vmem [thread:$0]  %s1, 512, %s18, [#allocation5], 128, 128, 8
    $region5: #{tpu_custom_call.1} parent=1 // pred_fallthru
      _
    // Predicated region
    $region6: #{tpu_custom_call.1} parent=1 // pred_check
      _
    $region7: #{tpu_custom_call.1} parent=1 // pred_check_branch
      %25 = sbr.rel (0) target = $region9
    $region8: #{tpu_custom_call.1} parent=1 // pred_region
      %s27 = ssub.s32 512, 512
      %28 = vsyncadd [#allocation8], %s27
      %s29 = sshll.u32 [#allocation7], 4
      %s30 = int_to_ptr.vmem [resolvable:$true] %s29
      %35 = dma.hbm_to_vmem [thread:$0]  %s2, 512, %s30, [#allocation8], 128, 128, 8
    $region9: #{tpu_custom_call.1} parent=1 // pred_fallthru
      _
    // Predicated region
    $region10: #{tpu_custom_call.1} parent=1 // pred_check
      _
    $region11: #{tpu_custom_call.1} parent=1 // pred_check_branch
      %37 = sbr.rel (0) target = $region13
    $region12: #{tpu_custom_call.1} parent=1 // pred_region
      %38 = dma.done [#allocation5], 512
    $region13: #{tpu_custom_call.1} parent=1 // pred_fallthru
      _
    // Predicated region
    $region14: #{tpu_custom_call.1} parent=1 // pred_check
      _
    $region15: #{tpu_custom_call.1} parent=1 // pred_check_branch
      %40 = sbr.rel (0) target = $region17
    $region16: #{tpu_custom_call.1} parent=1 // pred_region
      %41 = dma.done [#allocation8], 512
    $region17: #{tpu_custom_call.1} parent=1 // pred_fallthru
      _
    %v42 = vld [vmem:[#allocation4] sm:$0xff]
    %s43 = scalar_lea.vmem [#allocation4], 8
    %v44 = vld [vmem:[%s43] sm:$0xff]
    %s45 = scalar_lea.vmem [#allocation4], 16
    %v46 = vld [vmem:[%s45] sm:$0xff]
    %s47 = scalar_lea.vmem [#allocation4], 24
    %v48 = vld [vmem:[%s47] sm:$0xff]
    %v49 = vld [vmem:[#allocation7] sm:$0xff]
    %s50 = scalar_lea.vmem [#allocation7], 8
    %v51 = vld [vmem:[%s50] sm:$0xff]
    %s52 = scalar_lea.vmem [#allocation7], 16
    %v53 = vld [vmem:[%s52] sm:$0xff]
    %s54 = scalar_lea.vmem [#allocation7], 24
    %v55 = vld [vmem:[%s54] sm:$0xff]
    %v56 = vmax.f32 %v42, %v49
    %v57 = vmax.f32 %v44, %v51
    %v58 = vmin.f32 %v46, %v53
    %v59 = vmin.f32 %v48, %v55
    %v60 = vsub.f32 %v58, %v56
    %v61 = vmax.f32 %v60, 0.0
    %v62 = vsub.f32 %v59, %v57
    %v63 = vmax.f32 %v62, 0.0
    %v64 = vmul.f32 %v61, %v63
    %v65 = vsub.f32 %v46, %v42
    %v66 = vsub.f32 %v48, %v44
    %v67 = vmul.f32 %v65, %v66
    %v68 = vsub.f32 %v53, %v49
    %v69 = vsub.f32 %v55, %v51
    %v70 = vmul.f32 %v68, %v69
    %v71 = vadd.f32 %v67, %v70
    %v72 = vsub.f32 %v71, %v64
    %v73 = vadd.f32 %v72, 1e-06
    %v74 = vrcp.pop %v73
    %v75 = vmul.f32 %v64, %v74
    %v76 = vsub.f32 1.0, %v75
    %v77 = vlaneseq
    %v78 = vshrl.u32 %v77, 7
    %v79 = vlaneseq
    %v80 = vand.u32 %v79, 127
    %s81 = smul.u32 0, 8
    %v82 = vstv %s81
    %v83 = vadd.s32 %v82, %v78
    %v84 = vmul.u32 %v83, 128
    %v85 = vadd.s32 %v84, %v80
    %s86 = sld [smem:[#allocation3]]
    %v87 = vstv %s86
    %vm88 = vcmp.lt.s32.totalorder %v85, %v87
    %v89 = vsel %vm88, %v76, 0.0
    %v90 = vadd.f32 %v89, 0.0
    %91 = vst [vmem:[#allocation9] sm:$0xff] %v90
    // Predicated region
    $region18: #{tpu_custom_call.1} parent=1 // pred_check
      _
    $region19: #{tpu_custom_call.1} parent=1 // pred_check_branch
      %93 = sbr.rel (0) target = $region21
    $region20: #{tpu_custom_call.1} parent=1 // pred_region
      %s95 = ssub.s32 128, 128
      %96 = vsyncadd [#allocation6], %s95
      %s98 = sshll.u32 [#allocation9], 4
      %s99 = int_to_ptr.vmem [resolvable:$true] %s98
      %101 = dma.vmem_to_hbm [thread:$0]  %s99, 128, %s3, [#allocation6]
    $region21: #{tpu_custom_call.1} parent=1 // pred_fallthru
      _
    // Predicated region
    $region22: #{tpu_custom_call.1} parent=1 // pred_check
      _
    $region23: #{tpu_custom_call.1} parent=1 // pred_check_branch
      %103 = sbr.rel (0) target = $region25
    $region24: #{tpu_custom_call.1} parent=1 // pred_region
      %104 = dma.done [#allocation6], 128
    $region25: #{tpu_custom_call.1} parent=1 // pred_fallthru
      _
    %105 = vsyncpa [#allocation5], 1
    %106 = vsyncpa [#allocation8], 1
    %107 = vsyncpa [#allocation6], 1

</llo_original>
